<compile_context>
chip_gen: v5e
topology: v5e:2x2
jax: 0.10.0
libtpu: 0.0.40
codegen_flags: <defaults>
</compile_context>

<pallas_src>
import jax
import jax.numpy as jnp
from jax.experimental import pallas as pl
from jax.experimental.pallas import tpu as pltpu


def _round_up(x, m):
    return (x + m - 1) // m * m


def _vmem_capacity_bytes():
    """Physical VMEM per TensorCore (64 MiB on v7x, 128 MiB on v5e/v6e)."""
    try:
        return int(pltpu.get_tpu_info().vmem_capacity_bytes)
    except Exception:  # pragma: no cover - conservative fallback (v7x size)
        return 64 * 1024 * 1024


def logreg_kernel(x_ref, w_ref, b_ref, o_ref):
    # x_ref: (tile, F) VMEM   w_ref: (1, F) VMEM (resident across grid steps)
    # b_ref: (1, 1) SMEM      o_ref: (1, tile) VMEM -- batch on lanes => lane-dense stores.
    z = jax.lax.dot_general(
        w_ref[...], x_ref[...],
        dimension_numbers=(((1,), (1,)), ((), ())),   # (1,F) . (tile,F)^T -> (1, tile)
        precision=jax.lax.Precision.HIGHEST,          # f32 parity with torch; MXU cost hidden under DMA
        preferred_element_type=jnp.float32,
    )
    z = z + b_ref[0, 0]
    # sigmoid via tanh: one EUP op per vreg, accurate to ~1 ulp.
    y = 0.5 * (jnp.tanh(0.5 * z) + 1.0)
    o_ref[...] = y.astype(o_ref.dtype)


def logistic_regression(x, weight, bias, *, max_rows_per_step=None):
    """x: [N, F] f32, weight: [1, F] f32 (nn.Linear layout), bias: [1] f32 -> [N, 1] f32."""
    n, f = x.shape
    w = jnp.asarray(weight, x.dtype).reshape(1, f)
    b = jnp.asarray(bias, jnp.float32).reshape(1, 1)

    itemsize = x.dtype.itemsize
    padded_f = _round_up(f, 128)              # lane padding of the minor dim in VMEM
    bytes_per_row = padded_f * itemsize

    vmem_cap = _vmem_capacity_bytes()
    # Double-buffered x stream should use <= ~half of VMEM  ->  per-block budget = cap/4.
    per_block_budget = vmem_cap // 4
    tile = (per_block_budget // bytes_per_row) // 128 * 128
    tile = max(tile, 128)

    # Keep >= ~8 grid steps for large N so the "parallel" axis shards across 2 TCs (v7x megacore).
    if n > 8 * 128:
        tile = min(tile, _round_up(pl.cdiv(n, 8), 128))
    if max_rows_per_step is not None:
        tile = min(tile, max(_round_up(max_rows_per_step, 128), 128))
    tile = min(tile, _round_up(n, 128))
    if tile >= n:
        tile = n                               # single full-array block (no alignment constraints)
    grid = (pl.cdiv(n, tile),)

    # Real double-buffered VMEM footprint -> explicit limit, capped at ~90% of physical VMEM.
    x_block = _round_up(tile, 8) * bytes_per_row
    o_block = 8 * _round_up(tile, 128) * itemsize
    w_block = 8 * padded_f * itemsize
    vmem_needed = 2 * x_block + 2 * o_block + 2 * w_block + (4 << 20)
    vmem_limit = int(min(int(0.9 * vmem_cap), max(vmem_needed, 32 << 20)))

    out = pl.pallas_call(
        logreg_kernel,
        out_shape=jax.ShapeDtypeStruct((1, n), x.dtype),
        grid=grid,
        in_specs=[
            pl.BlockSpec((tile, f), lambda i: (i, 0)),                        # x row tile (ragged tail OK)
            pl.BlockSpec((1, f), lambda i: (0, 0)),                           # weight, resident in VMEM
            pl.BlockSpec((1, 1), lambda i: (0, 0), memory_space=pltpu.SMEM),  # scalar bias
        ],
        out_specs=pl.BlockSpec((1, tile), lambda i: (0, i)),                  # lane-dense output
        compiler_params=pltpu.CompilerParams(
            dimension_semantics=("parallel",),
            vmem_limit_bytes=vmem_limit,
        ),
    )(x, w, b)

    return out[0, :n].reshape(n, 1)


def _reference(x, weight, bias):
    z = jnp.dot(x, weight.T, precision=jax.lax.Precision.HIGHEST) + bias
    return jax.nn.sigmoid(z)


if __name__ == "__main__":
    key = jax.random.PRNGKey(0)
    k_x, k_w, k_b = jax.random.split(key, 3)

    batch = 8
    n_features = 32

    x = jax.random.normal(k_x, (batch, n_features), dtype=jnp.float32)
    # PyTorch nn.Linear(n_features, 1) parameter shapes: weight [1, F], bias [1].
    weight = jax.random.normal(k_w, (1, n_features), dtype=jnp.float32) * 0.1
    bias = jax.random.normal(k_b, (1,), dtype=jnp.float32) * 0.1

    y = jax.block_until_ready(logistic_regression(x, weight, bias))
    y_ref = _reference(x, weight, bias)
    assert y.shape == (batch, 1)
    assert jnp.allclose(y, y_ref, atol=1e-5), "mismatch vs reference"

    # Multi-step grid with a ragged (non-divisible) final block and no wrapper-side padding.
    x2 = jax.random.normal(jax.random.fold_in(k_x, 1), (4096 + 37, n_features), dtype=jnp.float32)
    y2 = jax.block_until_ready(logistic_regression(x2, weight, bias, max_rows_per_step=512))
    y2_ref = _reference(x2, weight, bias)
    assert y2.shape == (x2.shape[0], 1)
    assert jnp.allclose(y2, y2_ref, atol=1e-5), "mismatch vs reference (tiled, ragged)"

    print("KERNEL_OK")
</pallas_src>

<mosaic_0001>
module attributes {stable_mosaic.version = 11 : i64} {
  func.func @logreg_kernel(%arg0: i32, %arg1: memref<8x32xf32, #tpu.memory_space<vmem>>, %arg2: memref<1x32xf32, #tpu.memory_space<vmem>>, %arg3: memref<1x1xf32, #tpu.memory_space<smem>>, %arg4: memref<1x8xf32, #tpu.memory_space<vmem>>) attributes {dimension_semantics = [#tpu.dimension_semantics<parallel>], iteration_bounds = array<i64: 1>, scalar_prefetch = 0 : i64, scratch_operands = 0 : i64, tpu.core_type = #tpu.core_type<tc>, window_params = [{transform_indices = @transform_0, window_bounds = array<i64: 8, 32>}, {pipeline_mode = #tpu.pipeline_mode<synchronous>, transform_indices = @transform_1, window_bounds = array<i64: 1, 32>}, {transform_indices = @transform_2, window_bounds = array<i64: 1, 1>}, {transform_indices = @transform_3, window_bounds = array<i64: 1, 8>}]} {
    %c0 = arith.constant 0 : index
    %c0_0 = arith.constant 0 : index
    %0 = vector.load %arg2[%c0, %c0_0] : memref<1x32xf32, #tpu.memory_space<vmem>>, vector<1x32xf32>
    %c0_1 = arith.constant 0 : index
    %c0_2 = arith.constant 0 : index
    %1 = vector.load %arg1[%c0_1, %c0_2] : memref<8x32xf32, #tpu.memory_space<vmem>>, vector<8x32xf32>
    %cst = arith.constant dense<0.000000e+00> : vector<1x8xf32>
    %2 = tpu.matmul %0, %1, %cst {dimension_numbers = #tpu.dot_dimension_numbers<[1], [1], [0], [0], [0, 0, 1, 0], [], []>, precision = #tpu.contract_precision<fp32>} : vector<1x32xf32>, vector<8x32xf32>, vector<1x8xf32> -> vector<1x8xf32>
    %c0_3 = arith.constant 0 : index
    %c0_4 = arith.constant 0 : index
    %3 = memref.load %arg3[%c0_3, %c0_4] : memref<1x1xf32, #tpu.memory_space<smem>>
    %4 = vector.broadcast %3 : f32 to vector<1x8xf32>
    %5 = arith.addf %2, %4 : vector<1x8xf32>
    %cst_5 = arith.constant 5.000000e-01 : f32
    %6 = vector.broadcast %cst_5 : f32 to vector<1x8xf32>
    %7 = arith.mulf %6, %5 : vector<1x8xf32>
    %8 = math.tanh %7 : vector<1x8xf32>
    %cst_6 = arith.constant 1.000000e+00 : f32
    %9 = vector.broadcast %cst_6 : f32 to vector<1x8xf32>
    %10 = arith.addf %8, %9 : vector<1x8xf32>
    %cst_7 = arith.constant 5.000000e-01 : f32
    %11 = vector.broadcast %cst_7 : f32 to vector<1x8xf32>
    %12 = arith.mulf %11, %10 : vector<1x8xf32>
    %c0_8 = arith.constant 0 : index
    %c0_9 = arith.constant 0 : index
    %13 = vector.load %arg4[%c0_8, %c0_9] : memref<1x8xf32, #tpu.memory_space<vmem>>, vector<1x8xf32>
    tpu.vector_store %arg4[%c0_8, %c0_9], %12 {strides = array<i32>} : memref<1x8xf32, #tpu.memory_space<vmem>>, vector<1x8xf32>,
    return
  }
  func.func @transform_0(%arg0: i32) -> (i32, i32) {
    %c0_i32 = arith.constant 0 : i32
    %c0_i32_0 = arith.constant 0 : i32
    return %arg0, %c0_i32 : i32, i32
  }
  func.func @transform_1(%arg0: i32) -> (i32, i32) {
    %c0_i32 = arith.constant 0 : i32
    %c0_i32_0 = arith.constant 0 : i32
    %c0_i32_1 = arith.constant 0 : i32
    return %c0_i32, %c0_i32_0 : i32, i32
  }
  func.func @transform_2(%arg0: i32) -> (i32, i32) {
    %c0_i32 = arith.constant 0 : i32
    %c0_i32_0 = arith.constant 0 : i32
    %c0_i32_1 = arith.constant 0 : i32
    return %c0_i32, %c0_i32_0 : i32, i32
  }
  func.func @transform_3(%arg0: i32) -> (i32, i32) {
    %c0_i32 = arith.constant 0 : i32
    %c0_i32_0 = arith.constant 0 : i32
    return %c0_i32, %arg0 : i32, i32
  }
}

</mosaic_0001>

<llo_original>
// kernel: tpu_custom_call.1
$region0: #{tpu_custom_call.1}
  #allocation0 [shape = 'u32[]', space=smem, size = 0x4, offset = 0x4, fixed_abs, tag = 'smem constant byte address 0x4 - core index']
  #allocation1 [shape = 'u32[72,128]{1,0:T(1,128)}', space=vmem, size = 0x9000, scoped, tag = 'internal scratch']
  #allocation2 [shape = 'f32[1,1]{1,0:T(1,128)S(6)}', space=smem, size = 0x200, scoped, tag = 'scoped memory for tpu_custom_call.1']
  %s0 = inlined_call_operand.hbm [shape: f32[8,32], index: 0, kind: input, shape index: {}]
  %s1 = inlined_call_operand.vmem [shape: f32[1,32], index: 1, kind: input, shape index: {}]
  %s2 = inlined_call_operand.<no memory space> [shape: f32[1,1], index: 2, kind: input, shape index: {}]
  %s3 = inlined_call_operand.hbm [shape: f32[1,8], index: 3, kind: output, shape index: {}]
  %s4 = sld [smem:[#allocation0]]
  $region26: #{tpu_custom_call.1} parent=0
    _
  %s6 = ssub.s32 1, %s4
  %s7 = scalar_select 0, %s6, %s4
  %8 = sst [smem:[#allocation2]] %s2
  $region1: #{tpu_custom_call.1} parent=0
    #allocation3 [shape = 'u8[4096]{0}', space=vmem, size = 0x1000, scoped, tag = 'input window, operand 0, single buffered']
    #allocation4 [shape = 's32[1]{0}', space=sflag, size = 0x4, scoped, tag = 'scoped memory for tpu_custom_call.1']
    #allocation5 [shape = 's32[1]{0}', space=sflag, size = 0x4, scoped, tag = 'scoped memory for tpu_custom_call.1']
    #allocation6 [shape = 'u8[512]{0}', space=vmem, size = 0x400, scoped, tag = 'output window, operand 0, single buffered']
    %9 = vsyncpa [#allocation4], 0
    %10 = vsyncpa [#allocation5], 0
    // Predicated region
    $region2: #{tpu_custom_call.1} parent=1 // pred_check
      _
    $region3: #{tpu_custom_call.1} parent=1 // pred_check_branch
      %12 = sbr.rel (0) target = $region5
    $region4: #{tpu_custom_call.1} parent=1 // pred_region
      %14 = vsyncadd [#allocation4], 0
      %s16 = sshll.u32 %s0, 4
      %s17 = int_to_ptr.hbm [resolvable:$true] %s16
      %s18 = sshll.u32 [#allocation3], 4
      %s19 = int_to_ptr.vmem [resolvable:$true] %s18
      %21 = dma.hbm_to_vmem [thread:$0]  %s17, 128, %s19, [#allocation4]
    $region5: #{tpu_custom_call.1} parent=1 // pred_fallthru
      _
    // Predicated region
    $region6: #{tpu_custom_call.1} parent=1 // pred_check
      _
    $region7: #{tpu_custom_call.1} parent=1 // pred_check_branch
      %23 = sbr.rel (0) target = $region9
    $region8: #{tpu_custom_call.1} parent=1 // pred_region
      _
    $region9: #{tpu_custom_call.1} parent=1 // pred_fallthru
      _
    // Predicated region
    $region10: #{tpu_custom_call.1} parent=1 // pred_check
      _
    $region11: #{tpu_custom_call.1} parent=1 // pred_check_branch
      %25 = sbr.rel (0) target = $region13
    $region12: #{tpu_custom_call.1} parent=1 // pred_region
      _
    $region13: #{tpu_custom_call.1} parent=1 // pred_fallthru
      _
    // Predicated region
    $region14: #{tpu_custom_call.1} parent=1 // pred_check
      _
    $region15: #{tpu_custom_call.1} parent=1 // pred_check_branch
      %27 = sbr.rel (0) target = $region17
    $region16: #{tpu_custom_call.1} parent=1 // pred_region
      %29 = dma.done [#allocation4], 128
    $region17: #{tpu_custom_call.1} parent=1 // pred_fallthru
      _
    %v30 = vld [vmem:[%s1] sm:$0x1]
    %v31 = vld [vmem:[#allocation3] sm:$0xff]
    %s32 = sld [smem:[#allocation2]]
    %v33 = vstv %s32
    %vm34 = vcmask 261120
    %v36 = vsel %vm34, %v30, 0
    %v39 = vsel %vm34, %v31, 0
    %41 = vmatpush.xpose.msra.mxu0 0.0
    %42 = vmatpush.xpose.msra.mxu0 0.0
    %43 = vmatpush.xpose.msra.mxu0 0.0
    %44 = vmatpush.xpose.msra.mxu0 0.0
    %45 = vmatpush.xpose.msra.mxu0 0.0
    %46 = vmatpush.xpose.msra.mxu0 0.0
    %47 = vmatpush.xpose.msra.mxu0 0.0
    %48 = vmatpush.xpose.msra.mxu0 0.0
    %49 = vmatpush.xpose.msra.mxu0 0.0
    %50 = vmatpush.xpose.msra.mxu0 0.0
    %51 = vmatpush.xpose.msra.mxu0 0.0
    %52 = vmatpush.xpose.msra.mxu0 0.0
    %53 = vmatpush.xpose.msra.mxu0 0.0
    %54 = vmatpush.xpose.msra.mxu0 0.0
    %55 = vmatpush.xpose.msra.mxu0 0.0
    %v56 = vand.u32 %v39, 4294901760
    %57 = vmatpush.xpose.msra.mxu0 %v56
    %v58 = vand.u32 %v36, 4294901760
    %v59 = vsub.f32 %v36, %v58
    %v60 = vand.u32 %v59, 4294901760
    %v61 = vsub.f32 %v59, %v60
    %v62 = vand.u32 %v61, 4294901760
    %63 = vmatmul.f32.gmra.mxu0 %v62
    %v64 = vpop.f32.mrf.mxu0
    %v65 = vadd.f32 %v33, %v64
    %66 = vdwg.mxu0
    %67 = vmatpush.xpose.msra.mxu0 0.0
    %68 = vmatpush.xpose.msra.mxu0 0.0
    %69 = vmatpush.xpose.msra.mxu0 0.0
    %70 = vmatpush.xpose.msra.mxu0 0.0
    %71 = vmatpush.xpose.msra.mxu0 0.0
    %72 = vmatpush.xpose.msra.mxu0 0.0
    %73 = vmatpush.xpose.msra.mxu0 0.0
    %74 = vmatpush.xpose.msra.mxu0 0.0
    %75 = vmatpush.xpose.msra.mxu0 0.0
    %76 = vmatpush.xpose.msra.mxu0 0.0
    %77 = vmatpush.xpose.msra.mxu0 0.0
    %78 = vmatpush.xpose.msra.mxu0 0.0
    %79 = vmatpush.xpose.msra.mxu0 0.0
    %80 = vmatpush.xpose.msra.mxu0 0.0
    %81 = vmatpush.xpose.msra.mxu0 0.0
    %v82 = vand.u32 %v39, 4294901760
    %v83 = vsub.f32 %v39, %v82
    %v84 = vand.u32 %v83, 4294901760
    %v85 = vsub.f32 %v83, %v84
    %v86 = vand.u32 %v85, 4294901760
    %87 = vmatpush.xpose.msra.mxu0 %v86
    %v88 = vand.u32 %v36, 4294901760
    %89 = vmatmul.f32.gmra.mxu0 %v88
    %v90 = vpop.f32.mrf.mxu0
    %v91 = vadd.f32 %v65, %v90
    %92 = vdwg.mxu0
    %93 = vmatpush.xpose.msra.mxu0 0.0
    %94 = vmatpush.xpose.msra.mxu0 0.0
    %95 = vmatpush.xpose.msra.mxu0 0.0
    %96 = vmatpush.xpose.msra.mxu0 0.0
    %97 = vmatpush.xpose.msra.mxu0 0.0
    %98 = vmatpush.xpose.msra.mxu0 0.0
    %99 = vmatpush.xpose.msra.mxu0 0.0
    %100 = vmatpush.xpose.msra.mxu0 0.0
    %101 = vmatpush.xpose.msra.mxu0 0.0
    %102 = vmatpush.xpose.msra.mxu0 0.0
    %103 = vmatpush.xpose.msra.mxu0 0.0
    %104 = vmatpush.xpose.msra.mxu0 0.0
    %105 = vmatpush.xpose.msra.mxu0 0.0
    %106 = vmatpush.xpose.msra.mxu0 0.0
    %107 = vmatpush.xpose.msra.mxu0 0.0
    %v108 = vand.u32 %v39, 4294901760
    %v109 = vsub.f32 %v39, %v108
    %110 = vmatpush.xpose.msra.mxu0 %v109
    %v111 = vand.u32 %v36, 4294901760
    %v112 = vsub.f32 %v36, %v111
    %113 = vmatmul.f32.gmra.mxu0 %v112
    %v114 = vpop.f32.mrf.mxu0
    %v115 = vadd.f32 %v91, %v114
    %116 = vdwg.mxu0
    %117 = vmatpush.xpose.msra.mxu0 0.0
    %118 = vmatpush.xpose.msra.mxu0 0.0
    %119 = vmatpush.xpose.msra.mxu0 0.0
    %120 = vmatpush.xpose.msra.mxu0 0.0
    %121 = vmatpush.xpose.msra.mxu0 0.0
    %122 = vmatpush.xpose.msra.mxu0 0.0
    %123 = vmatpush.xpose.msra.mxu0 0.0
    %124 = vmatpush.xpose.msra.mxu0 0.0
    %125 = vmatpush.xpose.msra.mxu0 0.0
    %126 = vmatpush.xpose.msra.mxu0 0.0
    %127 = vmatpush.xpose.msra.mxu0 0.0
    %128 = vmatpush.xpose.msra.mxu0 0.0
    %129 = vmatpush.xpose.msra.mxu0 0.0
    %130 = vmatpush.xpose.msra.mxu0 0.0
    %131 = vmatpush.xpose.msra.mxu0 0.0
    %v132 = vand.u32 %v39, 4294901760
    %133 = vmatpush.xpose.msra.mxu0 %v132
    %v134 = vand.u32 %v36, 4294901760
    %v135 = vsub.f32 %v36, %v134
    %v136 = vand.u32 %v135, 4294901760
    %137 = vmatmul.f32.gmra.mxu0 %v136
    %v138 = vpop.f32.mrf.mxu0
    %v139 = vadd.f32 %v115, %v138
    %140 = vdwg.mxu0
    %141 = vmatpush.xpose.msra.mxu0 0.0
    %142 = vmatpush.xpose.msra.mxu0 0.0
    %143 = vmatpush.xpose.msra.mxu0 0.0
    %144 = vmatpush.xpose.msra.mxu0 0.0
    %145 = vmatpush.xpose.msra.mxu0 0.0
    %146 = vmatpush.xpose.msra.mxu0 0.0
    %147 = vmatpush.xpose.msra.mxu0 0.0
    %148 = vmatpush.xpose.msra.mxu0 0.0
    %149 = vmatpush.xpose.msra.mxu0 0.0
    %150 = vmatpush.xpose.msra.mxu0 0.0
    %151 = vmatpush.xpose.msra.mxu0 0.0
    %152 = vmatpush.xpose.msra.mxu0 0.0
    %153 = vmatpush.xpose.msra.mxu0 0.0
    %154 = vmatpush.xpose.msra.mxu0 0.0
    %155 = vmatpush.xpose.msra.mxu0 0.0
    %v156 = vand.u32 %v39, 4294901760
    %v157 = vsub.f32 %v39, %v156
    %v158 = vand.u32 %v157, 4294901760
    %159 = vmatpush.xpose.msra.mxu0 %v158
    %v160 = vand.u32 %v36, 4294901760
    %161 = vmatmul.f32.gmra.mxu0 %v160
    %v162 = vpop.f32.mrf.mxu0
    %v163 = vadd.f32 %v139, %v162
    %164 = vdwg.mxu0
    %165 = vmatpush.xpose.msra.mxu0 0.0
    %166 = vmatpush.xpose.msra.mxu0 0.0
    %167 = vmatpush.xpose.msra.mxu0 0.0
    %168 = vmatpush.xpose.msra.mxu0 0.0
    %169 = vmatpush.xpose.msra.mxu0 0.0
    %170 = vmatpush.xpose.msra.mxu0 0.0
    %171 = vmatpush.xpose.msra.mxu0 0.0
    %172 = vmatpush.xpose.msra.mxu0 0.0
    %173 = vmatpush.xpose.msra.mxu0 0.0
    %174 = vmatpush.xpose.msra.mxu0 0.0
    %175 = vmatpush.xpose.msra.mxu0 0.0
    %176 = vmatpush.xpose.msra.mxu0 0.0
    %177 = vmatpush.xpose.msra.mxu0 0.0
    %178 = vmatpush.xpose.msra.mxu0 0.0
    %179 = vmatpush.xpose.msra.mxu0 0.0
    %v180 = vand.u32 %v39, 4294901760
    %181 = vmatpush.xpose.msra.mxu0 %v180
    %v182 = vand.u32 %v36, 4294901760
    %183 = vmatmul.f32.gmra.mxu0 %v182
    %v184 = vpop.f32.mrf.mxu0
    %v185 = vadd.f32 %v163, %v184
    %186 = vdwg.mxu0
    %v187 = vmul.f32 %v185, 0.5
    %v188 = vtanh.pop %v187
    %v189 = vadd.f32 %v188, 1.0
    %v190 = vmul.f32 %v189, 0.5
    %vm191 = vcmask 57344
    %192 = vst.msk [vmem:[#allocation6] sm:$0x1] %vm191, %v190
    // Predicated region
    $region18: #{tpu_custom_call.1} parent=1 // pred_check
      _
    $region19: #{tpu_custom_call.1} parent=1 // pred_check_branch
      %194 = sbr.rel (0) target = $region21
    $region20: #{tpu_custom_call.1} parent=1 // pred_region
      %196 = vsyncadd [#allocation5], 0
      %s198 = sshll.u32 [#allocation6], 4
      %s199 = int_to_ptr.vmem [resolvable:$true] %s198
      %s200 = sshll.u32 %s3, 4
      %s201 = int_to_ptr.hbm [resolvable:$true] %s200
      %203 = dma.vmem_to_hbm [thread:$0]  %s199, 16, %s201, [#allocation5]
    $region21: #{tpu_custom_call.1} parent=1 // pred_fallthru
      _
    // Predicated region
    $region22: #{tpu_custom_call.1} parent=1 // pred_check
      _
    $region23: #{tpu_custom_call.1} parent=1 // pred_check_branch
      %205 = sbr.rel (0) target = $region25
    $region24: #{tpu_custom_call.1} parent=1 // pred_region
      %207 = dma.done [#allocation5], 16
    $region25: #{tpu_custom_call.1} parent=1 // pred_fallthru
      _
    %208 = vsyncpa [#allocation4], 1
    %209 = vsyncpa [#allocation5], 1

</llo_original>
